<compile_context>
chip_gen: v5e
topology: v5e:2x2
jax: 0.10.0
libtpu: 0.0.40
codegen_flags: <defaults>
</compile_context>

<pallas_src>
import jax
import jax.numpy as jnp
from jax import lax
from jax.experimental import pallas as pl
from jax.experimental.pallas import tpu as pltpu


def _round_up(v, m):
    return (v + m - 1) // m * m


def _linear_kernel(x_ref, w_ref, b_ref, o_ref):
    # x_ref: (TB, F), w_ref: (L, F)  (PyTorch layout, contract on last dims),
    # b_ref: (1, L), o_ref: (TB, L).
    acc = lax.dot_general(
        x_ref[...], w_ref[...],
        dimension_numbers=(((1,), (1,)), ((), ())),
        preferred_element_type=jnp.float32)
    o_ref[...] = (acc + b_ref[...].astype(jnp.float32)).astype(o_ref.dtype)


def auxiliary_classifier_forward(x, weight, bias, *, max_block_batch=1024):
    """x: (B, feature_dim); weight: (num_labels, feature_dim); bias: (num_labels,).
    Returns (B, num_labels) == x @ weight.T + bias."""
    B, F = x.shape
    L, F_w = weight.shape
    assert F == F_w and bias.shape == (L,)

    itemsize = jnp.dtype(x.dtype).itemsize
    F_pad = _round_up(F, 128)   # lane padding of the feature axis
    L_lane = _round_up(L, 128)  # lane padding of the label axis (output)

    # Batch tile: multiple of 8 (sublane), bounded by max_block_batch and by a
    # ~4 MiB-per-buffer x footprint so the double-buffered x tiles stay well
    # inside the 32 MiB scoped-VMEM default and v7x's 64 MiB physical VMEM.
    tb_by_vmem = max(8, ((4 * 1024 * 1024) // (F_pad * itemsize)) // 8 * 8)
    TB = max(8, min(_round_up(B, 8), max_block_batch, tb_by_vmem))

    B_pad = _round_up(B, TB)
    if B_pad != B:
        x = jnp.pad(x, ((0, B_pad - B), (0, 0)))

    b2 = bias.reshape(1, L)  # 2-D so it maps onto a (sublane, lane) vreg tile

    # Conservative VMEM estimate (double-buffered x / out, resident w + bias).
    vmem_estimate = (
        2 * TB * F_pad * itemsize                 # x tiles (double-buffered)
        + 2 * _round_up(L, 8) * F_pad * itemsize  # weight (resident)
        + 2 * 8 * L_lane * itemsize               # bias
        + 2 * TB * L_lane * itemsize              # out tiles (double-buffered)
    )
    vmem_limit = int(min(64 * 1024 * 1024,
                         max(32 * 1024 * 1024, 2 * vmem_estimate)))

    out = pl.pallas_call(
        _linear_kernel,
        out_shape=jax.ShapeDtypeStruct((B_pad, L), x.dtype),
        grid_spec=pl.GridSpec(
            grid=(B_pad // TB,),
            in_specs=[
                pl.BlockSpec((TB, F), lambda i: (i, 0)),  # x: tiled over batch
                pl.BlockSpec((L, F), lambda i: (0, 0)),   # weight: resident
                pl.BlockSpec((1, L), lambda i: (0, 0)),   # bias: resident
            ],
            out_specs=pl.BlockSpec((TB, L), lambda i: (i, 0)),
        ),
        compiler_params=pltpu.CompilerParams(
            # Independent batch tiles -> shardable across v7x's 2 TensorCores.
            dimension_semantics=("parallel",),
            vmem_limit_bytes=vmem_limit,
        ),
        cost_estimate=pl.CostEstimate(
            flops=2 * B_pad * F * L,
            transcendentals=0,
            bytes_accessed=(B_pad * F + L * F + L + B_pad * L) * itemsize,
        ),
    )(x, weight, b2)

    return out[:B] if B_pad != B else out


if __name__ == "__main__":
    # Small shapes consistent with the module: x is (batch, feature_dim).
    batch, feature_dim, num_labels = 8, 32, 4

    key = jax.random.PRNGKey(0)
    kx, kw, kb = jax.random.split(key, 3)

    x = jax.random.normal(kx, (batch, feature_dim), dtype=jnp.float32)

    # Deterministic PyTorch-style init: U(-1/sqrt(fan_in), 1/sqrt(fan_in))
    bound = 1.0 / (feature_dim ** 0.5)
    weight = jax.random.uniform(
        kw, (num_labels, feature_dim), dtype=jnp.float32,
        minval=-bound, maxval=bound)
    bias = jax.random.uniform(
        kb, (num_labels,), dtype=jnp.float32, minval=-bound, maxval=bound)

    out = auxiliary_classifier_forward(x, weight, bias)
    out = jax.block_until_ready(out)

    # Reference check against plain JAX (same semantics as nn.Linear).
    ref = x @ weight.T + bias
    assert out.shape == (batch, num_labels)
    assert jnp.allclose(out, ref, atol=1e-5, rtol=1e-5)

    print("KERNEL_OK")
</pallas_src>

<mosaic_0001>
module attributes {stable_mosaic.version = 11 : i64} {
  func.func @_linear_kernel(%arg0: i32, %arg1: memref<8x32xf32, #tpu.memory_space<vmem>>, %arg2: memref<4x32xf32, #tpu.memory_space<vmem>>, %arg3: memref<1x4xf32, #tpu.memory_space<vmem>>, %arg4: memref<8x4xf32, #tpu.memory_space<vmem>>) attributes {dimension_semantics = [#tpu.dimension_semantics<parallel>], iteration_bounds = array<i64: 1>, scalar_prefetch = 0 : i64, scratch_operands = 0 : i64, tpu.core_type = #tpu.core_type<tc>, window_params = [{transform_indices = @transform_0, window_bounds = array<i64: 8, 32>}, {pipeline_mode = #tpu.pipeline_mode<synchronous>, transform_indices = @transform_1, window_bounds = array<i64: 4, 32>}, {pipeline_mode = #tpu.pipeline_mode<synchronous>, transform_indices = @transform_2, window_bounds = array<i64: 1, 4>}, {transform_indices = @transform_3, window_bounds = array<i64: 8, 4>}]} {
    %c0 = arith.constant 0 : index
    %c0_0 = arith.constant 0 : index
    %0 = vector.load %arg1[%c0, %c0_0] : memref<8x32xf32, #tpu.memory_space<vmem>>, vector<8x32xf32>
    %c0_1 = arith.constant 0 : index
    %c0_2 = arith.constant 0 : index
    %1 = vector.load %arg2[%c0_1, %c0_2] : memref<4x32xf32, #tpu.memory_space<vmem>>, vector<4x32xf32>
    %cst = arith.constant dense<0.000000e+00> : vector<8x4xf32>
    %2 = tpu.matmul %0, %1, %cst {dimension_numbers = #tpu.dot_dimension_numbers<[1], [1], [0], [0], [0, 0, 1, 0], [], []>} : vector<8x32xf32>, vector<4x32xf32>, vector<8x4xf32> -> vector<8x4xf32>
    %c0_3 = arith.constant 0 : index
    %c0_4 = arith.constant 0 : index
    %3 = vector.load %arg3[%c0_3, %c0_4] : memref<1x4xf32, #tpu.memory_space<vmem>>, vector<1x4xf32>
    %4 = vector.broadcast %3 : vector<1x4xf32> to vector<8x4xf32>
    %5 = arith.addf %2, %4 : vector<8x4xf32>
    %c0_5 = arith.constant 0 : index
    %c0_6 = arith.constant 0 : index
    %6 = vector.load %arg4[%c0_5, %c0_6] : memref<8x4xf32, #tpu.memory_space<vmem>>, vector<8x4xf32>
    tpu.vector_store %arg4[%c0_5, %c0_6], %5 {strides = array<i32>} : memref<8x4xf32, #tpu.memory_space<vmem>>, vector<8x4xf32>,
    return
  }
  func.func @transform_0(%arg0: i32) -> (i32, i32) {
    %c0_i32 = arith.constant 0 : i32
    %c0_i32_0 = arith.constant 0 : i32
    return %arg0, %c0_i32 : i32, i32
  }
  func.func @transform_1(%arg0: i32) -> (i32, i32) {
    %c0_i32 = arith.constant 0 : i32
    %c0_i32_0 = arith.constant 0 : i32
    %c0_i32_1 = arith.constant 0 : i32
    return %c0_i32, %c0_i32_0 : i32, i32
  }
  func.func @transform_2(%arg0: i32) -> (i32, i32) {
    %c0_i32 = arith.constant 0 : i32
    %c0_i32_0 = arith.constant 0 : i32
    %c0_i32_1 = arith.constant 0 : i32
    return %c0_i32, %c0_i32_0 : i32, i32
  }
  func.func @transform_3(%arg0: i32) -> (i32, i32) {
    %c0_i32 = arith.constant 0 : i32
    %c0_i32_0 = arith.constant 0 : i32
    return %arg0, %c0_i32 : i32, i32
  }
}

</mosaic_0001>

<llo_original>
// kernel: tpu_custom_call.1
$region0: #{tpu_custom_call.1}
  #allocation0 [shape = 'u32[]', space=smem, size = 0x4, offset = 0x4, fixed_abs, tag = 'smem constant byte address 0x4 - core index']
  #allocation1 [shape = 'u32[72,128]{1,0:T(1,128)}', space=vmem, size = 0x9000, scoped, tag = 'internal scratch']
  %s0 = inlined_call_operand.hbm [shape: f32[8,32], index: 0, kind: input, shape index: {}]
  %s1 = inlined_call_operand.hbm [shape: f32[4,32], index: 1, kind: input, shape index: {}]
  %s2 = inlined_call_operand.vmem [shape: f32[1,4], index: 2, kind: input, shape index: {}]
  %s3 = inlined_call_operand.vmem [shape: f32[8,4], index: 3, kind: output, shape index: {}]
  %s4 = sld [smem:[#allocation0]]
  $region30: #{tpu_custom_call.1} parent=0
    _
  %s6 = ssub.s32 1, %s4
  %s7 = scalar_select 0, %s6, %s4
  $region1: #{tpu_custom_call.1} parent=0
    #allocation2 [shape = 'u8[4096]{0}', space=vmem, size = 0x1000, scoped, tag = 'input window, operand 0, single buffered']
    #allocation3 [shape = 's32[1]{0}', space=sflag, size = 0x4, scoped, tag = 'scoped memory for tpu_custom_call.1']
    #allocation4 [shape = 'u8[2048]{0}', space=vmem, size = 0x800, scoped, tag = 'input window, operand 1, single buffered']
    #allocation5 [shape = 's32[1]{0}', space=sflag, size = 0x4, scoped, tag = 'scoped memory for tpu_custom_call.1']
    %8 = vsyncpa [#allocation3], 0
    %9 = vsyncpa [#allocation5], 0
    // Predicated region
    $region2: #{tpu_custom_call.1} parent=1 // pred_check
      _
    $region3: #{tpu_custom_call.1} parent=1 // pred_check_branch
      %11 = sbr.rel (0) target = $region5
    $region4: #{tpu_custom_call.1} parent=1 // pred_region
      %13 = vsyncadd [#allocation3], 0
      %s15 = sshll.u32 %s0, 4
      %s16 = int_to_ptr.hbm [resolvable:$true] %s15
      %s17 = sshll.u32 [#allocation2], 4
      %s18 = int_to_ptr.vmem [resolvable:$true] %s17
      %20 = dma.hbm_to_vmem [thread:$0]  %s16, 128, %s18, [#allocation3]
    $region5: #{tpu_custom_call.1} parent=1 // pred_fallthru
      _
    // Predicated region
    $region6: #{tpu_custom_call.1} parent=1 // pred_check
      _
    $region7: #{tpu_custom_call.1} parent=1 // pred_check_branch
      %22 = sbr.rel (0) target = $region9
    $region8: #{tpu_custom_call.1} parent=1 // pred_region
      %24 = vsyncadd [#allocation5], 0
      %s26 = sshll.u32 %s1, 4
      %s27 = int_to_ptr.hbm [resolvable:$true] %s26
      %s28 = sshll.u32 [#allocation4], 4
      %s29 = int_to_ptr.vmem [resolvable:$true] %s28
      %31 = dma.hbm_to_vmem [thread:$0]  %s27, 64, %s29, [#allocation5]
    $region9: #{tpu_custom_call.1} parent=1 // pred_fallthru
      _
    // Predicated region
    $region10: #{tpu_custom_call.1} parent=1 // pred_check
      _
    $region11: #{tpu_custom_call.1} parent=1 // pred_check_branch
      %33 = sbr.rel (0) target = $region13
    $region12: #{tpu_custom_call.1} parent=1 // pred_region
      _
    $region13: #{tpu_custom_call.1} parent=1 // pred_fallthru
      _
    // Predicated region
    $region14: #{tpu_custom_call.1} parent=1 // pred_check
      _
    $region15: #{tpu_custom_call.1} parent=1 // pred_check_branch
      %35 = sbr.rel (0) target = $region17
    $region16: #{tpu_custom_call.1} parent=1 // pred_region
      %37 = dma.done [#allocation3], 128
    $region17: #{tpu_custom_call.1} parent=1 // pred_fallthru
      _
    // Predicated region
    $region18: #{tpu_custom_call.1} parent=1 // pred_check
      _
    $region19: #{tpu_custom_call.1} parent=1 // pred_check_branch
      %39 = sbr.rel (0) target = $region21
    $region20: #{tpu_custom_call.1} parent=1 // pred_region
      %41 = dma.done [#allocation5], 64
    $region21: #{tpu_custom_call.1} parent=1 // pred_fallthru
      _
    %v42 = vld [vmem:[#allocation2] sm:$0xff]
    %v43 = vld [vmem:[#allocation4] sm:$0xf]
    %v44 = vld [vmem:[%s2] sm:$0x1]
    %v46 = vperm.slane %v44, 0
    %vm48 = vcmask 261120
    %v50 = vsel %vm48, %v42, 0
    %v53 = vsel %vm48, %v43, 0
    %55 = vmatpush.xpose.msra.mxu0 0.0
    %56 = vmatpush.xpose.msra.mxu0 0.0
    %57 = vmatpush.xpose.msra.mxu0 0.0
    %58 = vmatpush.xpose.msra.mxu0 0.0
    %59 = vmatpush.xpose.msra.mxu0 0.0
    %60 = vmatpush.xpose.msra.mxu0 0.0
    %61 = vmatpush.xpose.msra.mxu0 0.0
    %62 = vmatpush.xpose.msra.mxu0 0.0
    %63 = vmatpush.xpose.msra.mxu0 0.0
    %64 = vmatpush.xpose.msra.mxu0 0.0
    %65 = vmatpush.xpose.msra.mxu0 0.0
    %66 = vmatpush.xpose.msra.mxu0 0.0
    %67 = vmatpush.xpose.msra.mxu0 0.0
    %68 = vmatpush.xpose.msra.mxu0 0.0
    %69 = vmatpush.xpose.msra.mxu0 0.0
    %70 = vmatpush.xpose.msra.mxu0 %v53
    %71 = vmatmul.f32.gmra.mxu0 %v50
    %v72 = vpop.f32.mrf.mxu0
    %v73 = vadd.f32 %v46, %v72
    %74 = vdwg.mxu0
    %vm75 = vcmask 31744
    %76 = vst.msk [vmem:[%s3] sm:$0xff] %vm75, %v73
    // Predicated region
    $region22: #{tpu_custom_call.1} parent=1 // pred_check
      _
    $region23: #{tpu_custom_call.1} parent=1 // pred_check_branch
      %78 = sbr.rel (0) target = $region25
    $region24: #{tpu_custom_call.1} parent=1 // pred_region
      _
    $region25: #{tpu_custom_call.1} parent=1 // pred_fallthru
      _
    // Predicated region
    $region26: #{tpu_custom_call.1} parent=1 // pred_check
      _
    $region27: #{tpu_custom_call.1} parent=1 // pred_check_branch
      %80 = sbr.rel (0) target = $region29
    $region28: #{tpu_custom_call.1} parent=1 // pred_region
      _
    $region29: #{tpu_custom_call.1} parent=1 // pred_fallthru
      _
    %81 = vsyncpa [#allocation3], 1
    %82 = vsyncpa [#allocation5], 1

</llo_original>
